<compile_context>
chip_gen: v6e
topology: v6e:2x2x1
jax: 0.10.0
libtpu: 0.0.40
codegen_flags: <defaults>
</compile_context>

<pallas_src>
import functools

import jax
import jax.numpy as jnp
from jax import lax
from jax.experimental import pallas as pl
from jax.experimental.pallas import tpu as pltpu


# -----------------------------------------------------------------------------
# Kernel
# -----------------------------------------------------------------------------
def lstm_block_kernel(x_ref, wih_ref, whh_ref, b_ref, h_out_ref,
                      h_sc, c_sc, gx_sc, *, seq_len, time_tile):
    """Process one (N-tile, S-tile) block of the LSTM recurrence.

    x_ref    : [tS, tN, F]   bf16 inputs for this block (seq-major)
    wih_ref  : [F, 4F]       bf16 fused input->hidden weights (gate cols i,f,g,o)
    whh_ref  : [F, 4F]       bf16 fused hidden->hidden weights
    b_ref    : [1, 4F]       f32 fused bias (b_ih + b_hh)
    h_out_ref: [tN, F]       f32 final hidden state (written at last S block)
    h_sc,c_sc: [tN, F]       f32 VMEM scratch carrying state across S blocks
    gx_sc    : [tS*tN, 4F]   f32 VMEM scratch holding the hoisted projection
    """
    s_idx = pl.program_id(1)

    @pl.when(s_idx == 0)
    def _init():
        h_sc[...] = jnp.zeros_like(h_sc)
        c_sc[...] = jnp.zeros_like(c_sc)

    tS, tN, F = x_ref.shape
    G = 4 * F

    # --- Hoisted fused input projection (no recurrent dependency) ------------
    # One [tS*tN, F] @ [F, 4F] matmul + one bias add per block; row t*tN + n
    # holds node n's fused pre-activation at block-local timestep t.
    x2d = x_ref[...].reshape(tS * tN, F)                       # bf16
    gx_sc[...] = (jnp.dot(x2d, wih_ref[...],
                          preferred_element_type=jnp.float32) + b_ref[...])

    whh = whh_ref[...]                                         # bf16 [F, 4F]

    # Lane mask selecting the tanh gate (g) inside the fused 4F-wide layout.
    # Hoisted out of the loop (JAX does not CSE broadcasts).
    lane = lax.broadcasted_iota(jnp.int32, (tN, G), 1)
    is_tanh_lane = (lane >= 2 * F) & (lane < 3 * F)

    needs_mask = (seq_len % time_tile) != 0                    # static

    # --- Serial recurrence over this block's timesteps ------------------------
    def step(t, carry):
        h, c = carry
        row = pl.multiple_of(t * tN, tN)
        gx = gx_sc[pl.ds(row, tN), :]                          # [tN, 4F] f32
        gates = gx + jnp.dot(h.astype(jnp.bfloat16), whh,
                             preferred_element_type=jnp.float32)
        # Lane-dense nonlinearities: one sigmoid + one tanh pass over 4F lanes.
        act = jnp.where(is_tanh_lane, jnp.tanh(gates), jax.nn.sigmoid(gates))
        i_g = act[:, 0 * F:1 * F]
        f_g = act[:, 1 * F:2 * F]
        g_g = act[:, 2 * F:3 * F]
        o_g = act[:, 3 * F:4 * F]
        c_new = f_g * c + i_g * g_g
        h_new = o_g * jnp.tanh(c_new)
        if needs_mask:
            valid = (s_idx * time_tile + t) < seq_len          # padded steps: keep state
            h_new = jnp.where(valid, h_new, h)
            c_new = jnp.where(valid, c_new, c)
        return h_new, c_new

    h, c = lax.fori_loop(0, tS, step, (h_sc[...], c_sc[...]),
                         unroll=min(8, tS))

    h_sc[...] = h
    c_sc[...] = c

    @pl.when(s_idx == pl.num_programs(1) - 1)
    def _finalize():
        h_out_ref[...] = h.astype(h_out_ref.dtype)


# -----------------------------------------------------------------------------
# Wrapper
# -----------------------------------------------------------------------------
def _round_up(x, m):
    return (x + m - 1) // m * m


def _vmem_limit_bytes(default_cap=64 * 1024 * 1024):
    """Generation-aware VMEM cap: ~75% of physical (96 MiB on v5e/v6e,
    48 MiB on v7x); conservative 48 MiB fallback if the query is unavailable."""
    try:
        info = pltpu.get_tpu_info()
        cap = int(getattr(info, "vmem_capacity_bytes", default_cap))
    except Exception:
        cap = default_cap
    return (cap * 3) // 4


@jax.jit
def lstm_aggregate(x_snf, params):
    """x_snf: [S, N, F] float32 (already row-permuted per node) -> [N, F]."""
    w_ih, w_hh, b_ih, b_hh = params          # PyTorch layout: [4F,F],[4F,F],[4F],[4F]
    S, N, F = x_snf.shape
    G = 4 * F

    # Time tile: big enough to amortize per-grid-step overhead; a non-divisible
    # S is zero-padded and masked inside the kernel (never falls back to tS=1).
    tS = S if S <= 64 else 64
    S_pad = _round_up(S, tS)

    # Node tile: sublane aligned; >= 2 tiles when possible so the parallel axis
    # shards across v7x's 2 TensorCores (harmless no-op on v5e/v6e).
    Np = _round_up(N, 8)
    if Np <= 8:
        tN = Np
    elif Np <= 256:
        tN = _round_up((Np + 1) // 2, 8)
    else:
        tN = 128
    Np = _round_up(Np, tN)

    # Fused gate-major weights [F, 4F]: one lane-dense matmul per projection /
    # timestep.  Gate column order (i, f, g, o) matches the PyTorch stacking.
    wih_f = w_ih.T.astype(jnp.bfloat16)                   # [F, 4F]
    whh_f = w_hh.T.astype(jnp.bfloat16)                   # [F, 4F]
    bias_f = (b_ih + b_hh).reshape(1, G).astype(jnp.float32)

    # Pad (S, N) and bf16-cast in one jitted expression (single HBM pass).
    x_pad = jnp.pad(x_snf.astype(jnp.bfloat16),
                    ((0, S_pad - S), (0, Np - N), (0, 0)))

    grid = (Np // tN, S_pad // tS)           # (N-tiles parallel, S-tiles arbitrary)

    kernel = functools.partial(lstm_block_kernel, seq_len=S, time_tile=tS)

    out = pl.pallas_call(
        kernel,
        out_shape=jax.ShapeDtypeStruct((Np, F), jnp.float32),
        grid=grid,
        in_specs=[
            pl.BlockSpec((tS, tN, F), lambda n, s: (s, n, 0)),
            pl.BlockSpec((F, G), lambda n, s: (0, 0)),
            pl.BlockSpec((F, G), lambda n, s: (0, 0)),
            pl.BlockSpec((1, G), lambda n, s: (0, 0)),
        ],
        out_specs=pl.BlockSpec((tN, F), lambda n, s: (n, 0)),
        scratch_shapes=[
            pltpu.VMEM((tN, F), jnp.float32),        # h carry across S blocks
            pltpu.VMEM((tN, F), jnp.float32),        # c carry across S blocks
            pltpu.VMEM((tS * tN, G), jnp.float32),   # hoisted fused projection
        ],
        compiler_params=pltpu.CompilerParams(
            dimension_semantics=("parallel", "arbitrary"),
            vmem_limit_bytes=_vmem_limit_bytes(),
        ),
    )(x_pad, wih_f, whh_f, bias_f)

    return out[:N]


def build_permuted_batch(gene_features, perm_key):
    """Mirror the per-node torch.randperm + stacking of LSTMAggregator.forward."""
    node_seq = sorted(gene_features.keys())
    feats = []
    for idx, node in enumerate(node_seq):
        f = gene_features[node]
        # torch.randperm -> deterministic per-node permutation (not bit-identical
        # to PyTorch's RNG, only distributionally equivalent).
        k = jax.random.fold_in(perm_key, idx)
        perm = jax.random.permutation(k, f.shape[0])
        feats.append(f[perm])
    return jnp.stack(feats, axis=1)          # [S, N, F] (seq-major for the kernel)


def lstm_aggregator_forward(gene_features, params, perm_key):
    x_snf = build_permuted_batch(gene_features, perm_key)
    return lstm_aggregate(x_snf, params)


# -----------------------------------------------------------------------------
# Parameters / reference
# -----------------------------------------------------------------------------
def init_lstm_params(key, feature_dim):
    """nn.LSTM-shaped parameters (gate order i, f, g, o), f32."""
    F = feature_dim
    bound = 1.0 / jnp.sqrt(jnp.float32(F))
    k1, k2, k3, k4 = jax.random.split(key, 4)
    w_ih = jax.random.uniform(k1, (4 * F, F), jnp.float32, -bound, bound)
    w_hh = jax.random.uniform(k2, (4 * F, F), jnp.float32, -bound, bound)
    b_ih = jax.random.uniform(k3, (4 * F,), jnp.float32, -bound, bound)
    b_hh = jax.random.uniform(k4, (4 * F,), jnp.float32, -bound, bound)
    return w_ih, w_hh, b_ih, b_hh


def lstm_reference(x_snf, w_ih, w_hh, b_ih, b_hh):
    """Pure-JAX f32 reference of nn.LSTM's final hidden state."""
    S, N, F = x_snf.shape
    h0 = jnp.zeros((N, F), jnp.float32)
    c0 = jnp.zeros((N, F), jnp.float32)

    def step(carry, x_t):
        h, c = carry
        gates = x_t @ w_ih.T + h @ w_hh.T + b_ih + b_hh
        i = jax.nn.sigmoid(gates[:, 0 * F:1 * F])
        f = jax.nn.sigmoid(gates[:, 1 * F:2 * F])
        g = jnp.tanh(gates[:, 2 * F:3 * F])
        o = jax.nn.sigmoid(gates[:, 3 * F:4 * F])
        c = f * c + i * g
        h = o * jnp.tanh(c)
        return (h, c), None

    (h, _), _ = lax.scan(step, (h0, c0), x_snf)
    return h


# -----------------------------------------------------------------------------
# Demo / self-test
# -----------------------------------------------------------------------------
if __name__ == "__main__":
    FEATURE_DIM = 32   # hidden = input = 32
    SEQ = 8            # features per node
    NUM_NODES = 4

    root = jax.random.PRNGKey(0)
    k_param, k_data, k_perm = jax.random.split(root, 3)

    params = init_lstm_params(k_param, FEATURE_DIM)

    gene_features = {}
    for n in range(NUM_NODES):
        kd = jax.random.fold_in(k_data, n)
        gene_features[n] = jax.random.normal(kd, (SEQ, FEATURE_DIM), jnp.float32)

    x_snf = build_permuted_batch(gene_features, k_perm)   # [S, N, F]
    out = lstm_aggregate(x_snf, params)                   # [N, F]
    out = jax.block_until_ready(out)

    ref = lstm_reference(x_snf, *params)
    max_err = float(jnp.max(jnp.abs(out - ref)))

    assert out.shape == (NUM_NODES, FEATURE_DIM), out.shape
    assert bool(jnp.all(jnp.isfinite(out)))
    assert max_err < 5e-2, f"max abs error vs f32 reference: {max_err}"
    print("KERNEL_OK")
</pallas_src>

<mosaic_0001>
module attributes {stable_mosaic.version = 11 : i64} {
  func.func @lstm_block_kernel(%arg0: i32, %arg1: i32, %arg2: memref<8x8x32xbf16, #tpu.memory_space<vmem>>, %arg3: memref<32x128xbf16, #tpu.memory_space<vmem>>, %arg4: memref<32x128xbf16, #tpu.memory_space<vmem>>, %arg5: memref<1x128xf32, #tpu.memory_space<vmem>>, %arg6: memref<8x32xf32, #tpu.memory_space<vmem>>, %arg7: memref<8x32xf32, #tpu.memory_space<vmem>>, %arg8: memref<8x32xf32, #tpu.memory_space<vmem>>, %arg9: memref<64x128xf32, #tpu.memory_space<vmem>>) attributes {dimension_semantics = [#tpu.dimension_semantics<parallel>, #tpu.dimension_semantics<arbitrary>], iteration_bounds = array<i64: 1, 1>, scalar_prefetch = 0 : i64, scratch_operands = 3 : i64, tpu.core_type = #tpu.core_type<tc>, window_params = [{transform_indices = @transform_0, window_bounds = array<i64: 8, 8, 32>}, {pipeline_mode = #tpu.pipeline_mode<synchronous>, transform_indices = @transform_1, window_bounds = array<i64: 32, 128>}, {pipeline_mode = #tpu.pipeline_mode<synchronous>, transform_indices = @transform_2, window_bounds = array<i64: 32, 128>}, {pipeline_mode = #tpu.pipeline_mode<synchronous>, transform_indices = @transform_3, window_bounds = array<i64: 1, 128>}, {transform_indices = @transform_4, window_bounds = array<i64: 8, 32>}]} {
    %c0_i32 = arith.constant 0 : i32
    %0 = arith.cmpi eq, %arg1, %c0_i32 : i32
    %1 = arith.extui %0 : i1 to i32
    %c0_i32_0 = arith.constant 0 : i32
    %2 = arith.cmpi ne, %1, %c0_i32_0 : i32
    scf.if %2 {
      %cst_54 = arith.constant 0.000000e+00 : f32
      %209 = vector.broadcast %cst_54 : f32 to vector<8x32xf32>
      %c0_55 = arith.constant 0 : index
      %c0_56 = arith.constant 0 : index
      %210 = vector.load %arg7[%c0_55, %c0_56] : memref<8x32xf32, #tpu.memory_space<vmem>>, vector<8x32xf32>
      tpu.vector_store %arg7[%c0_55, %c0_56], %209 {strides = array<i32>} : memref<8x32xf32, #tpu.memory_space<vmem>>, vector<8x32xf32>,
      %cst_57 = arith.constant 0.000000e+00 : f32
      %211 = vector.broadcast %cst_57 : f32 to vector<8x32xf32>
      %c0_58 = arith.constant 0 : index
      %c0_59 = arith.constant 0 : index
      %212 = vector.load %arg8[%c0_58, %c0_59] : memref<8x32xf32, #tpu.memory_space<vmem>>, vector<8x32xf32>
      tpu.vector_store %arg8[%c0_58, %c0_59], %211 {strides = array<i32>} : memref<8x32xf32, #tpu.memory_space<vmem>>, vector<8x32xf32>,
    } else {
    }
    %c0 = arith.constant 0 : index
    %c0_1 = arith.constant 0 : index
    %c0_2 = arith.constant 0 : index
    %3 = vector.load %arg2[%c0, %c0_1, %c0_2] : memref<8x8x32xbf16, #tpu.memory_space<vmem>>, vector<8x8x32xbf16>
    %4 = vector.shape_cast %3 : vector<8x8x32xbf16> to vector<64x32xbf16>
    %c0_3 = arith.constant 0 : index
    %c0_4 = arith.constant 0 : index
    %5 = vector.load %arg3[%c0_3, %c0_4] : memref<32x128xbf16, #tpu.memory_space<vmem>>, vector<32x128xbf16>
    %cst = arith.constant dense<0.000000e+00> : vector<64x128xf32>
    %6 = tpu.matmul %4, %5, %cst {dimension_numbers = #tpu.dot_dimension_numbers<[1], [0], [0], [1], [0, 0, 1, 1], [], []>} : vector<64x32xbf16>, vector<32x128xbf16>, vector<64x128xf32> -> vector<64x128xf32>
    %c0_5 = arith.constant 0 : index
    %c0_6 = arith.constant 0 : index
    %7 = vector.load %arg5[%c0_5, %c0_6] : memref<1x128xf32, #tpu.memory_space<vmem>>, vector<1x128xf32>
    %8 = vector.broadcast %7 : vector<1x128xf32> to vector<64x128xf32>
    %9 = arith.addf %6, %8 : vector<64x128xf32>
    %c0_7 = arith.constant 0 : index
    %c0_8 = arith.constant 0 : index
    %10 = vector.load %arg9[%c0_7, %c0_8] : memref<64x128xf32, #tpu.memory_space<vmem>>, vector<64x128xf32>
    tpu.vector_store %arg9[%c0_7, %c0_8], %9 {strides = array<i32>} : memref<64x128xf32, #tpu.memory_space<vmem>>, vector<64x128xf32>,
    %c0_9 = arith.constant 0 : index
    %c0_10 = arith.constant 0 : index
    %11 = vector.load %arg4[%c0_9, %c0_10] : memref<32x128xbf16, #tpu.memory_space<vmem>>, vector<32x128xbf16>
    %12 = tpu.iota {dimensions = array<i32: 1>} : vector<8x128xi32>
    %c64_i32 = arith.constant 64 : i32
    %13 = vector.broadcast %c64_i32 : i32 to vector<8x128xi32>
    %14 = arith.cmpi sge, %12, %13 : vector<8x128xi32>
    %c96_i32 = arith.constant 96 : i32
    %15 = vector.broadcast %c96_i32 : i32 to vector<8x128xi32>
    %16 = arith.cmpi slt, %12, %15 : vector<8x128xi32>
    %17 = arith.andi %14, %16 : vector<8x128xi1>
    %c0_11 = arith.constant 0 : index
    %c0_12 = arith.constant 0 : index
    %18 = vector.load %arg7[%c0_11, %c0_12] : memref<8x32xf32, #tpu.memory_space<vmem>>, vector<8x32xf32>
    %c0_13 = arith.constant 0 : index
    %c0_14 = arith.constant 0 : index
    %19 = vector.load %arg8[%c0_13, %c0_14] : memref<8x32xf32, #tpu.memory_space<vmem>>, vector<8x32xf32>
    %c0_i32_15 = arith.constant 0 : i32
    %c8_i32 = arith.constant 8 : i32
    %20 = arith.muli %c0_i32_15, %c8_i32 : i32
    %21 = tpu.assume_multiple %20, 8 : i32
    %22 = arith.index_cast %21 : i32 to index
    %c0_16 = arith.constant 0 : index
    %23 = vector.load %arg9[%22, %c0_16] : memref<64x128xf32, #tpu.memory_space<vmem>>, vector<8x128xf32>
    %24 = arith.truncf %18 : vector<8x32xf32> to vector<8x32xbf16>
    %cst_17 = arith.constant dense<0.000000e+00> : vector<8x128xf32>
    %25 = tpu.matmul %24, %11, %cst_17 {dimension_numbers = #tpu.dot_dimension_numbers<[1], [0], [0], [1], [0, 0, 1, 1], [], []>} : vector<8x32xbf16>, vector<32x128xbf16>, vector<8x128xf32> -> vector<8x128xf32>
    %26 = arith.addf %23, %25 : vector<8x128xf32>
    %27 = math.tanh %26 : vector<8x128xf32>
    %28 = arith.negf %26 : vector<8x128xf32>
    %29 = math.exp %28 : vector<8x128xf32>
    %cst_18 = arith.constant 1.000000e+00 : f32
    %30 = vector.broadcast %cst_18 : f32 to vector<8x128xf32>
    %31 = arith.addf %30, %29 : vector<8x128xf32>
    %32 = arith.divf %30, %31 : vector<8x128xf32>
    %33 = arith.select %17, %27, %32 : vector<8x128xi1>, vector<8x128xf32>
    %34 = vector.extract_strided_slice %33 {offsets = [0, 0], sizes = [8, 32], strides = [1, 1]} : vector<8x128xf32> to vector<8x32xf32>
    %35 = vector.extract_strided_slice %33 {offsets = [0, 32], sizes = [8, 32], strides = [1, 1]} : vector<8x128xf32> to vector<8x32xf32>
    %36 = vector.extract_strided_slice %33 {offsets = [0, 64], sizes = [8, 32], strides = [1, 1]} : vector<8x128xf32> to vector<8x32xf32>
    %37 = vector.extract_strided_slice %33 {offsets = [0, 96], sizes = [8, 32], strides = [1, 1]} : vector<8x128xf32> to vector<8x32xf32>
    %38 = arith.mulf %35, %19 : vector<8x32xf32>
    %39 = arith.mulf %34, %36 : vector<8x32xf32>
    %40 = arith.addf %38, %39 : vector<8x32xf32>
    %41 = math.tanh %40 : vector<8x32xf32>
    %42 = arith.mulf %37, %41 : vector<8x32xf32>
    %c1_i32 = arith.constant 1 : i32
    %c8_i32_19 = arith.constant 8 : i32
    %43 = arith.muli %c1_i32, %c8_i32_19 : i32
    %44 = tpu.assume_multiple %43, 8 : i32
    %45 = arith.index_cast %44 : i32 to index
    %c0_20 = arith.constant 0 : index
    %46 = vector.load %arg9[%45, %c0_20] : memref<64x128xf32, #tpu.memory_space<vmem>>, vector<8x128xf32>
    %47 = arith.truncf %42 : vector<8x32xf32> to vector<8x32xbf16>
    %cst_21 = arith.constant dense<0.000000e+00> : vector<8x128xf32>
    %48 = tpu.matmul %47, %11, %cst_21 {dimension_numbers = #tpu.dot_dimension_numbers<[1], [0], [0], [1], [0, 0, 1, 1], [], []>} : vector<8x32xbf16>, vector<32x128xbf16>, vector<8x128xf32> -> vector<8x128xf32>
    %49 = arith.addf %46, %48 : vector<8x128xf32>
    %50 = math.tanh %49 : vector<8x128xf32>
    %51 = arith.negf %49 : vector<8x128xf32>
    %52 = math.exp %51 : vector<8x128xf32>
    %cst_22 = arith.constant 1.000000e+00 : f32
    %53 = vector.broadcast %cst_22 : f32 to vector<8x128xf32>
    %54 = arith.addf %53, %52 : vector<8x128xf32>
    %55 = arith.divf %53, %54 : vector<8x128xf32>
    %56 = arith.select %17, %50, %55 : vector<8x128xi1>, vector<8x128xf32>
    %57 = vector.extract_strided_slice %56 {offsets = [0, 0], sizes = [8, 32], strides = [1, 1]} : vector<8x128xf32> to vector<8x32xf32>
    %58 = vector.extract_strided_slice %56 {offsets = [0, 32], sizes = [8, 32], strides = [1, 1]} : vector<8x128xf32> to vector<8x32xf32>
    %59 = vector.extract_strided_slice %56 {offsets = [0, 64], sizes = [8, 32], strides = [1, 1]} : vector<8x128xf32> to vector<8x32xf32>
    %60 = vector.extract_strided_slice %56 {offsets = [0, 96], sizes = [8, 32], strides = [1, 1]} : vector<8x128xf32> to vector<8x32xf32>
    %61 = arith.mulf %58, %40 : vector<8x32xf32>
    %62 = arith.mulf %57, %59 : vector<8x32xf32>
    %63 = arith.addf %61, %62 : vector<8x32xf32>
    %64 = math.tanh %63 : vector<8x32xf32>
    %65 = arith.mulf %60, %64 : vector<8x32xf32>
    %c2_i32 = arith.constant 2 : i32
    %c8_i32_23 = arith.constant 8 : i32
    %66 = arith.muli %c2_i32, %c8_i32_23 : i32
    %67 = tpu.assume_multiple %66, 8 : i32
    %68 = arith.index_cast %67 : i32 to index
    %c0_24 = arith.constant 0 : index
    %69 = vector.load %arg9[%68, %c0_24] : memref<64x128xf32, #tpu.memory_space<vmem>>, vector<8x128xf32>
    %70 = arith.truncf %65 : vector<8x32xf32> to vector<8x32xbf16>
    %cst_25 = arith.constant dense<0.000000e+00> : vector<8x128xf32>
    %71 = tpu.matmul %70, %11, %cst_25 {dimension_numbers = #tpu.dot_dimension_numbers<[1], [0], [0], [1], [0, 0, 1, 1], [], []>} : vector<8x32xbf16>, vector<32x128xbf16>, vector<8x128xf32> -> vector<8x128xf32>
    %72 = arith.addf %69, %71 : vector<8x128xf32>
    %73 = math.tanh %72 : vector<8x128xf32>
    %74 = arith.negf %72 : vector<8x128xf32>
    %75 = math.exp %74 : vector<8x128xf32>
    %cst_26 = arith.constant 1.000000e+00 : f32
    %76 = vector.broadcast %cst_26 : f32 to vector<8x128xf32>
    %77 = arith.addf %76, %75 : vector<8x128xf32>
    %78 = arith.divf %76, %77 : vector<8x128xf32>
    %79 = arith.select %17, %73, %78 : vector<8x128xi1>, vector<8x128xf32>
    %80 = vector.extract_strided_slice %79 {offsets = [0, 0], sizes = [8, 32], strides = [1, 1]} : vector<8x128xf32> to vector<8x32xf32>
    %81 = vector.extract_strided_slice %79 {offsets = [0, 32], sizes = [8, 32], strides = [1, 1]} : vector<8x128xf32> to vector<8x32xf32>
    %82 = vector.extract_strided_slice %79 {offsets = [0, 64], sizes = [8, 32], strides = [1, 1]} : vector<8x128xf32> to vector<8x32xf32>
    %83 = vector.extract_strided_slice %79 {offsets = [0, 96], sizes = [8, 32], strides = [1, 1]} : vector<8x128xf32> to vector<8x32xf32>
    %84 = arith.mulf %81, %63 : vector<8x32xf32>
    %85 = arith.mulf %80, %82 : vector<8x32xf32>
    %86 = arith.addf %84, %85 : vector<8x32xf32>
    %87 = math.tanh %86 : vector<8x32xf32>
    %88 = arith.mulf %83, %87 : vector<8x32xf32>
    %c3_i32 = arith.constant 3 : i32
    %c8_i32_27 = arith.constant 8 : i32
    %89 = arith.muli %c3_i32, %c8_i32_27 : i32
    %90 = tpu.assume_multiple %89, 8 : i32
    %91 = arith.index_cast %90 : i32 to index
    %c0_28 = arith.constant 0 : index
    %92 = vector.load %arg9[%91, %c0_28] : memref<64x128xf32, #tpu.memory_space<vmem>>, vector<8x128xf32>
    %93 = arith.truncf %88 : vector<8x32xf32> to vector<8x32xbf16>
    %cst_29 = arith.constant dense<0.000000e+00> : vector<8x128xf32>
    %94 = tpu.matmul %93, %11, %cst_29 {dimension_numbers = #tpu.dot_dimension_numbers<[1], [0], [0], [1], [0, 0, 1, 1], [], []>} : vector<8x32xbf16>, vector<32x128xbf16>, vector<8x128xf32> -> vector<8x128xf32>
    %95 = arith.addf %92, %94 : vector<8x128xf32>
    %96 = math.tanh %95 : vector<8x128xf32>
    %97 = arith.negf %95 : vector<8x128xf32>
    %98 = math.exp %97 : vector<8x128xf32>
    %cst_30 = arith.constant 1.000000e+00 : f32
    %99 = vector.broadcast %cst_30 : f32 to vector<8x128xf32>
    %100 = arith.addf %99, %98 : vector<8x128xf32>
    %101 = arith.divf %99, %100 : vector<8x128xf32>
    %102 = arith.select %17, %96, %101 : vector<8x128xi1>, vector<8x128xf32>
    %103 = vector.extract_strided_slice %102 {offsets = [0, 0], sizes = [8, 32], strides = [1, 1]} : vector<8x128xf32> to vector<8x32xf32>
    %104 = vector.extract_strided_slice %102 {offsets = [0, 32], sizes = [8, 32], strides = [1, 1]} : vector<8x128xf32> to vector<8x32xf32>
    %105 = vector.extract_strided_slice %102 {offsets = [0, 64], sizes = [8, 32], strides = [1, 1]} : vector<8x128xf32> to vector<8x32xf32>
    %106 = vector.extract_strided_slice %102 {offsets = [0, 96], sizes = [8, 32], strides = [1, 1]} : vector<8x128xf32> to vector<8x32xf32>
    %107 = arith.mulf %104, %86 : vector<8x32xf32>
    %108 = arith.mulf %103, %105 : vector<8x32xf32>
    %109 = arith.addf %107, %108 : vector<8x32xf32>
    %110 = math.tanh %109 : vector<8x32xf32>
    %111 = arith.mulf %106, %110 : vector<8x32xf32>
    %c4_i32 = arith.constant 4 : i32
    %c8_i32_31 = arith.constant 8 : i32
    %112 = arith.muli %c4_i32, %c8_i32_31 : i32
    %113 = tpu.assume_multiple %112, 8 : i32
    %114 = arith.index_cast %113 : i32 to index
    %c0_32 = arith.constant 0 : index
    %115 = vector.load %arg9[%114, %c0_32] : memref<64x128xf32, #tpu.memory_space<vmem>>, vector<8x128xf32>
    %116 = arith.truncf %111 : vector<8x32xf32> to vector<8x32xbf16>
    %cst_33 = arith.constant dense<0.000000e+00> : vector<8x128xf32>
    %117 = tpu.matmul %116, %11, %cst_33 {dimension_numbers = #tpu.dot_dimension_numbers<[1], [0], [0], [1], [0, 0, 1, 1], [], []>} : vector<8x32xbf16>, vector<32x128xbf16>, vector<8x128xf32> -> vector<8x128xf32>
    %118 = arith.addf %115, %117 : vector<8x128xf32>
    %119 = math.tanh %118 : vector<8x128xf32>
    %120 = arith.negf %118 : vector<8x128xf32>
    %121 = math.exp %120 : vector<8x128xf32>
    %cst_34 = arith.constant 1.000000e+00 : f32
    %122 = vector.broadcast %cst_34 : f32 to vector<8x128xf32>
    %123 = arith.addf %122, %121 : vector<8x128xf32>
    %124 = arith.divf %122, %123 : vector<8x128xf32>
    %125 = arith.select %17, %119, %124 : vector<8x128xi1>, vector<8x128xf32>
    %126 = vector.extract_strided_slice %125 {offsets = [0, 0], sizes = [8, 32], strides = [1, 1]} : vector<8x128xf32> to vector<8x32xf32>
    %127 = vector.extract_strided_slice %125 {offsets = [0, 32], sizes = [8, 32], strides = [1, 1]} : vector<8x128xf32> to vector<8x32xf32>
    %128 = vector.extract_strided_slice %125 {offsets = [0, 64], sizes = [8, 32], strides = [1, 1]} : vector<8x128xf32> to vector<8x32xf32>
    %129 = vector.extract_strided_slice %125 {offsets = [0, 96], sizes = [8, 32], strides = [1, 1]} : vector<8x128xf32> to vector<8x32xf32>
    %130 = arith.mulf %127, %109 : vector<8x32xf32>
    %131 = arith.mulf %126, %128 : vector<8x32xf32>
    %132 = arith.addf %130, %131 : vector<8x32xf32>
    %133 = math.tanh %132 : vector<8x32xf32>
    %134 = arith.mulf %129, %133 : vector<8x32xf32>
    %c5_i32 = arith.constant 5 : i32
    %c8_i32_35 = arith.constant 8 : i32
    %135 = arith.muli %c5_i32, %c8_i32_35 : i32
    %136 = tpu.assume_multiple %135, 8 : i32
    %137 = arith.index_cast %136 : i32 to index
    %c0_36 = arith.constant 0 : index
    %138 = vector.load %arg9[%137, %c0_36] : memref<64x128xf32, #tpu.memory_space<vmem>>, vector<8x128xf32>
    %139 = arith.truncf %134 : vector<8x32xf32> to vector<8x32xbf16>
    %cst_37 = arith.constant dense<0.000000e+00> : vector<8x128xf32>
    %140 = tpu.matmul %139, %11, %cst_37 {dimension_numbers = #tpu.dot_dimension_numbers<[1], [0], [0], [1], [0, 0, 1, 1], [], []>} : vector<8x32xbf16>, vector<32x128xbf16>, vector<8x128xf32> -> vector<8x128xf32>
    %141 = arith.addf %138, %140 : vector<8x128xf32>
    %142 = math.tanh %141 : vector<8x128xf32>
    %143 = arith.negf %141 : vector<8x128xf32>
    %144 = math.exp %143 : vector<8x128xf32>
    %cst_38 = arith.constant 1.000000e+00 : f32
    %145 = vector.broadcast %cst_38 : f32 to vector<8x128xf32>
    %146 = arith.addf %145, %144 : vector<8x128xf32>
    %147 = arith.divf %145, %146 : vector<8x128xf32>
    %148 = arith.select %17, %142, %147 : vector<8x128xi1>, vector<8x128xf32>
    %149 = vector.extract_strided_slice %148 {offsets = [0, 0], sizes = [8, 32], strides = [1, 1]} : vector<8x128xf32> to vector<8x32xf32>
    %150 = vector.extract_strided_slice %148 {offsets = [0, 32], sizes = [8, 32], strides = [1, 1]} : vector<8x128xf32> to vector<8x32xf32>
    %151 = vector.extract_strided_slice %148 {offsets = [0, 64], sizes = [8, 32], strides = [1, 1]} : vector<8x128xf32> to vector<8x32xf32>
    %152 = vector.extract_strided_slice %148 {offsets = [0, 96], sizes = [8, 32], strides = [1, 1]} : vector<8x128xf32> to vector<8x32xf32>
    %153 = arith.mulf %150, %132 : vector<8x32xf32>
    %154 = arith.mulf %149, %151 : vector<8x32xf32>
    %155 = arith.addf %153, %154 : vector<8x32xf32>
    %156 = math.tanh %155 : vector<8x32xf32>
    %157 = arith.mulf %152, %156 : vector<8x32xf32>
    %c6_i32 = arith.constant 6 : i32
    %c8_i32_39 = arith.constant 8 : i32
    %158 = arith.muli %c6_i32, %c8_i32_39 : i32
    %159 = tpu.assume_multiple %158, 8 : i32
    %160 = arith.index_cast %159 : i32 to index
    %c0_40 = arith.constant 0 : index
    %161 = vector.load %arg9[%160, %c0_40] : memref<64x128xf32, #tpu.memory_space<vmem>>, vector<8x128xf32>
    %162 = arith.truncf %157 : vector<8x32xf32> to vector<8x32xbf16>
    %cst_41 = arith.constant dense<0.000000e+00> : vector<8x128xf32>
    %163 = tpu.matmul %162, %11, %cst_41 {dimension_numbers = #tpu.dot_dimension_numbers<[1], [0], [0], [1], [0, 0, 1, 1], [], []>} : vector<8x32xbf16>, vector<32x128xbf16>, vector<8x128xf32> -> vector<8x128xf32>
    %164 = arith.addf %161, %163 : vector<8x128xf32>
    %165 = math.tanh %164 : vector<8x128xf32>
    %166 = arith.negf %164 : vector<8x128xf32>
    %167 = math.exp %166 : vector<8x128xf32>
    %cst_42 = arith.constant 1.000000e+00 : f32
    %168 = vector.broadcast %cst_42 : f32 to vector<8x128xf32>
    %169 = arith.addf %168, %167 : vector<8x128xf32>
    %170 = arith.divf %168, %169 : vector<8x128xf32>
    %171 = arith.select %17, %165, %170 : vector<8x128xi1>, vector<8x128xf32>
    %172 = vector.extract_strided_slice %171 {offsets = [0, 0], sizes = [8, 32], strides = [1, 1]} : vector<8x128xf32> to vector<8x32xf32>
    %173 = vector.extract_strided_slice %171 {offsets = [0, 32], sizes = [8, 32], strides = [1, 1]} : vector<8x128xf32> to vector<8x32xf32>
    %174 = vector.extract_strided_slice %171 {offsets = [0, 64], sizes = [8, 32], strides = [1, 1]} : vector<8x128xf32> to vector<8x32xf32>
    %175 = vector.extract_strided_slice %171 {offsets = [0, 96], sizes = [8, 32], strides = [1, 1]} : vector<8x128xf32> to vector<8x32xf32>
    %176 = arith.mulf %173, %155 : vector<8x32xf32>
    %177 = arith.mulf %172, %174 : vector<8x32xf32>
    %178 = arith.addf %176, %177 : vector<8x32xf32>
    %179 = math.tanh %178 : vector<8x32xf32>
    %180 = arith.mulf %175, %179 : vector<8x32xf32>
    %c7_i32 = arith.constant 7 : i32
    %c8_i32_43 = arith.constant 8 : i32
    %181 = arith.muli %c7_i32, %c8_i32_43 : i32
    %182 = tpu.assume_multiple %181, 8 : i32
    %183 = arith.index_cast %182 : i32 to index
    %c0_44 = arith.constant 0 : index
    %184 = vector.load %arg9[%183, %c0_44] : memref<64x128xf32, #tpu.memory_space<vmem>>, vector<8x128xf32>
    %185 = arith.truncf %180 : vector<8x32xf32> to vector<8x32xbf16>
    %cst_45 = arith.constant dense<0.000000e+00> : vector<8x128xf32>
    %186 = tpu.matmul %185, %11, %cst_45 {dimension_numbers = #tpu.dot_dimension_numbers<[1], [0], [0], [1], [0, 0, 1, 1], [], []>} : vector<8x32xbf16>, vector<32x128xbf16>, vector<8x128xf32> -> vector<8x128xf32>
    %187 = arith.addf %184, %186 : vector<8x128xf32>
    %188 = math.tanh %187 : vector<8x128xf32>
    %189 = arith.negf %187 : vector<8x128xf32>
    %190 = math.exp %189 : vector<8x128xf32>
    %cst_46 = arith.constant 1.000000e+00 : f32
    %191 = vector.broadcast %cst_46 : f32 to vector<8x128xf32>
    %192 = arith.addf %191, %190 : vector<8x128xf32>
    %193 = arith.divf %191, %192 : vector<8x128xf32>
    %194 = arith.select %17, %188, %193 : vector<8x128xi1>, vector<8x128xf32>
    %195 = vector.extract_strided_slice %194 {offsets = [0, 0], sizes = [8, 32], strides = [1, 1]} : vector<8x128xf32> to vector<8x32xf32>
    %196 = vector.extract_strided_slice %194 {offsets = [0, 32], sizes = [8, 32], strides = [1, 1]} : vector<8x128xf32> to vector<8x32xf32>
    %197 = vector.extract_strided_slice %194 {offsets = [0, 64], sizes = [8, 32], strides = [1, 1]} : vector<8x128xf32> to vector<8x32xf32>
    %198 = vector.extract_strided_slice %194 {offsets = [0, 96], sizes = [8, 32], strides = [1, 1]} : vector<8x128xf32> to vector<8x32xf32>
    %199 = arith.mulf %196, %178 : vector<8x32xf32>
    %200 = arith.mulf %195, %197 : vector<8x32xf32>
    %201 = arith.addf %199, %200 : vector<8x32xf32>
    %202 = math.tanh %201 : vector<8x32xf32>
    %203 = arith.mulf %198, %202 : vector<8x32xf32>
    %c8_i32_47 = arith.constant 8 : i32
    %c0_48 = arith.constant 0 : index
    %c0_49 = arith.constant 0 : index
    %204 = vector.load %arg7[%c0_48, %c0_49] : memref<8x32xf32, #tpu.memory_space<vmem>>, vector<8x32xf32>
    tpu.vector_store %arg7[%c0_48, %c0_49], %203 {strides = array<i32>} : memref<8x32xf32, #tpu.memory_space<vmem>>, vector<8x32xf32>,
    %c0_50 = arith.constant 0 : index
    %c0_51 = arith.constant 0 : index
    %205 = vector.load %arg8[%c0_50, %c0_51] : memref<8x32xf32, #tpu.memory_space<vmem>>, vector<8x32xf32>
    tpu.vector_store %arg8[%c0_50, %c0_51], %201 {strides = array<i32>} : memref<8x32xf32, #tpu.memory_space<vmem>>, vector<8x32xf32>,
    %c0_i32_52 = arith.constant 0 : i32
    %206 = arith.cmpi eq, %arg1, %c0_i32_52 : i32
    %207 = arith.extui %206 : i1 to i32
    %c0_i32_53 = arith.constant 0 : i32
    %208 = arith.cmpi ne, %207, %c0_i32_53 : i32
    scf.if %208 {
      %c0_54 = arith.constant 0 : index
      %c0_55 = arith.constant 0 : index
      %209 = vector.load %arg6[%c0_54, %c0_55] : memref<8x32xf32, #tpu.memory_space<vmem>>, vector<8x32xf32>
      tpu.vector_store %arg6[%c0_54, %c0_55], %203 {strides = array<i32>} : memref<8x32xf32, #tpu.memory_space<vmem>>, vector<8x32xf32>,
    } else {
    }
    return
  }
  func.func @transform_0(%arg0: i32, %arg1: i32) -> (i32, i32, i32) {
    %c0_i32 = arith.constant 0 : i32
    %c0_i32_0 = arith.constant 0 : i32
    return %arg1, %arg0, %c0_i32 : i32, i32, i32
  }
  func.func @transform_1(%arg0: i32, %arg1: i32) -> (i32, i32) {
    %c0_i32 = arith.constant 0 : i32
    %c0_i32_0 = arith.constant 0 : i32
    %c0_i32_1 = arith.constant 0 : i32
    return %c0_i32, %c0_i32_0 : i32, i32
  }
  func.func @transform_2(%arg0: i32, %arg1: i32) -> (i32, i32) {
    %c0_i32 = arith.constant 0 : i32
    %c0_i32_0 = arith.constant 0 : i32
    %c0_i32_1 = arith.constant 0 : i32
    return %c0_i32, %c0_i32_0 : i32, i32
  }
  func.func @transform_3(%arg0: i32, %arg1: i32) -> (i32, i32) {
    %c0_i32 = arith.constant 0 : i32
    %c0_i32_0 = arith.constant 0 : i32
    %c0_i32_1 = arith.constant 0 : i32
    return %c0_i32, %c0_i32_0 : i32, i32
  }
  func.func @transform_4(%arg0: i32, %arg1: i32) -> (i32, i32) {
    %c0_i32 = arith.constant 0 : i32
    %c0_i32_0 = arith.constant 0 : i32
    return %arg0, %c0_i32 : i32, i32
  }
}

</mosaic_0001>

<llo_original>
// kernel: lstm_aggregate.1
$region0: #{lstm_aggregate.1}
  #allocation0 [shape = 'u32[]', space=smem, size = 0x4, offset = 0x4, fixed_abs, tag = 'smem constant byte address 0x4 - core index']
  #allocation1 [shape = 'u32[144,128]{1,0:T(1,128)}', space=vmem, size = 0x12000, scoped, tag = 'internal scratch']
  #allocation2 [shape = 'f32[8,32]{1,0:T(8,128)}', space=vmem, size = 0x1000, scoped, tag = 'scratch operand']
  #allocation3 [shape = 'f32[8,32]{1,0:T(8,128)}', space=vmem, size = 0x1000, scoped, tag = 'scratch operand']
  #allocation4 [shape = 'f32[64,128]{1,0:T(8,128)}', space=vmem, size = 0x8000, scoped, tag = 'scratch operand']
  %s0 = inlined_call_operand.vmem [shape: bf16[8,8,32], index: 0, kind: input, shape index: {}]
  %s1 = inlined_call_operand.vmem [shape: bf16[32,128], index: 1, kind: input, shape index: {}]
  %s2 = inlined_call_operand.vmem [shape: bf16[32,128], index: 2, kind: input, shape index: {}]
  %s3 = inlined_call_operand.vmem [shape: f32[1,128], index: 3, kind: input, shape index: {}]
  %s4 = inlined_call_operand.vmem [shape: f32[8,32], index: 4, kind: output, shape index: {}]
  %s5 = sld [smem:[#allocation0]]
  $region34: #{lstm_aggregate.1} parent=0
    _
  %s7 = ssub.s32 1, %s5
  %s8 = scalar_select 0, %s7, %s5
  // Predicated region
  $region2: #{lstm_aggregate.1} parent=0 // pred_check
    _
  $region3: #{lstm_aggregate.1} parent=0 // pred_check_branch
    %10 = sbr.rel (0) target = $region5
  $region4: #{lstm_aggregate.1} parent=0 // pred_region
    _
  $region5: #{lstm_aggregate.1} parent=0 // pred_fallthru
    _
  // Predicated region
  $region6: #{lstm_aggregate.1} parent=0 // pred_check
    _
  $region7: #{lstm_aggregate.1} parent=0 // pred_check_branch
    %12 = sbr.rel (0) target = $region9
  $region8: #{lstm_aggregate.1} parent=0 // pred_region
    _
  $region9: #{lstm_aggregate.1} parent=0 // pred_fallthru
    _
  // Predicated region
  $region10: #{lstm_aggregate.1} parent=0 // pred_check
    _
  $region11: #{lstm_aggregate.1} parent=0 // pred_check_branch
    %14 = sbr.rel (0) target = $region13
  $region12: #{lstm_aggregate.1} parent=0 // pred_region
    _
  $region13: #{lstm_aggregate.1} parent=0 // pred_fallthru
    _
  // Predicated region
  $region14: #{lstm_aggregate.1} parent=0 // pred_check
    _
  $region15: #{lstm_aggregate.1} parent=0 // pred_check_branch
    %16 = sbr.rel (0) target = $region17
  $region16: #{lstm_aggregate.1} parent=0 // pred_region
    _
  $region17: #{lstm_aggregate.1} parent=0 // pred_fallthru
    _
  %p18 = scmp.eq.s32.totalorder 0, 0
  // Predicated region
  $region18: #{lstm_aggregate.1} parent=0 // pred_check
    %p19 = pneg %p18
  $region19: #{lstm_aggregate.1} parent=0 // pred_check_branch
    %21 = sbr.rel (%p19) target = $region21
  $region20: #{lstm_aggregate.1} parent=0 // pred_region
    %vm22 = vcmask 261120
    %23 = vst.msk [vmem:[#allocation2] sm:$0xff] %vm22, 0.0
    %24 = vst.msk [vmem:[#allocation3] sm:$0xff] %vm22, 0.0
  $region21: #{lstm_aggregate.1} parent=0 // pred_fallthru
    _
  %v25 = vld [vmem:[%s0] sm:$0xf]
  %v26 = vld [vmem:[%s0 + $0x4] sm:$0xf]
  %v27 = vld [vmem:[%s0 + $0x8] sm:$0xf]
  %v28 = vld [vmem:[%s0 + $0xc] sm:$0xf]
  %v29 = vld [vmem:[%s0 + $0x10] sm:$0xf]
  %v30 = vld [vmem:[%s0 + $0x14] sm:$0xf]
  %v31 = vld [vmem:[%s0 + $0x18] sm:$0xf]
  %v32 = vld [vmem:[%s0 + $0x1c] sm:$0xf]
  %v33 = vld [vmem:[%s1] sm:$0xf]
  %v34 = vld [vmem:[%s1 + $0x4] sm:$0xf]
  %v35 = vld [vmem:[%s1 + $0x8] sm:$0xf]
  %v36 = vld [vmem:[%s1 + $0xc] sm:$0xf]
  %v37 = vld [vmem:[%s3] sm:$0x1]
  %v39 = vlaneseq
  %v40 = vshrl.u32 %v39, 7
  %v41 = vsub.s32 0, %v40
  %v42 = vrot.slane %v37, %v41
  %v52 = vunpack.c.l.b16 %v25
  %v53 = vunpack.c.l.b16 %v26
  %v54 = vunpack.c.l.b16 %v27
  %v55 = vunpack.c.l.b16 %v28
  %v56 = vunpack.c.l.b16 %v29
  %v57 = vunpack.c.l.b16 %v30
  %v58 = vunpack.c.l.b16 %v31
  %v59 = vunpack.c.l.b16 %v32
  %v60 = vpack.c.b16 %v53, %v52
  %v61 = vpack.c.b16 %v55, %v54
  %v62 = vpack.c.b16 %v57, %v56
  %v63 = vpack.c.b16 %v59, %v58
  %v68 = vunpack.c.l.b16 %v33
  %v69 = vunpack.c.l.b16 %v34
  %v70 = vunpack.c.l.b16 %v35
  %v71 = vunpack.c.l.b16 %v36
  %v72 = vpack.c.b16 %v69, %v68
  %v73 = vpack.c.b16 %v71, %v70
  %vm76 = vcmask 261120
  %v78 = vsel %vm76, %v60, 0
  %v81 = vsel %vm76, %v61, 0
  %v84 = vsel %vm76, %v62, 0
  %v87 = vsel %vm76, %v63, 0
  %89 = vmatprep.subr.bf16.mxu0 0
  %90 = vmatpush1.bf16.msra.mxu0 0
  %91 = vmatprep.subr.bf16.mxu0 0
  %92 = vmatpush1.bf16.msra.mxu0 0
  %93 = vmatprep.subr.bf16.mxu0 0
  %94 = vmatpush1.bf16.msra.mxu0 0
  %95 = vmatprep.subr.bf16.mxu0 0
  %96 = vmatpush1.bf16.msra.mxu0 0
  %97 = vmatprep.subr.bf16.mxu0 0
  %98 = vmatpush1.bf16.msra.mxu0 0
  %99 = vmatprep.subr.bf16.mxu0 0
  %100 = vmatpush1.bf16.msra.mxu0 0
  %101 = vmatprep.subr.bf16.mxu0 0
  %102 = vmatpush1.bf16.msra.mxu0 %v73
  %103 = vmatprep.subr.bf16.mxu0 0
  %104 = vmatpush1.bf16.msra.mxu0 %v72
  %105 = vmatprep.subr.bf16.mxu0 0
  %106 = vmatpush2.bf16.msra.mxu0 0
  %107 = vmatprep.subr.bf16.mxu0 0
  %108 = vmatpush2.bf16.msra.mxu0 0
  %109 = vmatprep.subr.bf16.mxu0 0
  %110 = vmatpush2.bf16.msra.mxu0 0
  %111 = vmatprep.subr.bf16.mxu0 0
  %112 = vmatpush2.bf16.msra.mxu0 0
  %113 = vmatprep.subr.bf16.mxu0 0
  %114 = vmatpush2.bf16.msra.mxu0 0
  %115 = vmatprep.subr.bf16.mxu0 0
  %116 = vmatpush2.bf16.msra.mxu0 0
  %117 = vmatprep.subr.bf16.mxu0 0
  %118 = vmatpush2.bf16.msra.mxu0 0
  %119 = vmatprep.subr.bf16.mxu0 0
  %120 = vmatpush2.bf16.msra.mxu0 0
  %121 = vmatprep.mubr.bf16.mxu0 0
  %122 = vmatmul.mubr.bf16.gmra.mxu0 %v78
  %v123 = vpop.f32.mrf.mxu0
  %v124 = vadd.f32 %v42, %v123
  %v125 = vpop.f32.mrf.mxu0
  %v126 = vpop.f32.mrf.mxu0
  %v127 = vadd.f32 %v42, %v126
  %v128 = vpop.f32.mrf.mxu0
  %129 = vmatprep.mubr.bf16.mxu0 0
  %130 = vmatmul.mubr.bf16.gmra.mxu0 %v81
  %v131 = vpop.f32.mrf.mxu0
  %v132 = vadd.f32 %v42, %v131
  %v133 = vpop.f32.mrf.mxu0
  %v134 = vpop.f32.mrf.mxu0
  %v135 = vadd.f32 %v42, %v134
  %v136 = vpop.f32.mrf.mxu0
  %137 = vmatprep.mubr.bf16.mxu0 0
  %138 = vmatmul.mubr.bf16.gmra.mxu0 %v84
  %v139 = vpop.f32.mrf.mxu0
  %v140 = vadd.f32 %v42, %v139
  %v141 = vpop.f32.mrf.mxu0
  %v142 = vpop.f32.mrf.mxu0
  %v143 = vadd.f32 %v42, %v142
  %v144 = vpop.f32.mrf.mxu0
  %145 = vmatprep.mubr.bf16.mxu0 0
  %146 = vmatmul.mubr.bf16.gmra.mxu0 %v87
  %v147 = vpop.f32.mrf.mxu0
  %v148 = vadd.f32 %v42, %v147
  %v149 = vpop.f32.mrf.mxu0
  %v150 = vpop.f32.mrf.mxu0
  %v151 = vadd.f32 %v42, %v150
  %v152 = vpop.f32.mrf.mxu0
  %153 = vdwg.mxu0
  %154 = vst [vmem:[#allocation4] sm:$0xff] %v124
  %155 = vst [vmem:[#allocation4 + $0x8] sm:$0xff] %v127
  %156 = vst [vmem:[#allocation4 + $0x10] sm:$0xff] %v132
  %157 = vst [vmem:[#allocation4 + $0x18] sm:$0xff] %v135
  %158 = vst [vmem:[#allocation4 + $0x20] sm:$0xff] %v140
  %159 = vst [vmem:[#allocation4 + $0x28] sm:$0xff] %v143
  %160 = vst [vmem:[#allocation4 + $0x30] sm:$0xff] %v148
  %161 = vst [vmem:[#allocation4 + $0x38] sm:$0xff] %v151
  %v162 = vld [vmem:[%s2] sm:$0xf]
  %v163 = vld [vmem:[%s2 + $0x4] sm:$0xf]
  %v164 = vld [vmem:[%s2 + $0x8] sm:$0xf]
  %v165 = vld [vmem:[%s2 + $0xc] sm:$0xf]
  %v166 = vlaneseq
  %v167 = vand.u32 %v166, 127
  %vm168 = vcmp.ge.s32.totalorder %v167, 64
  %vm169 = vcmp.lt.s32.totalorder %v167, 96
  %vm170 = vmand %vm168, %vm169
  %v171 = vld [vmem:[#allocation2] sm:$0xff]
  %v172 = vld [vmem:[#allocation3] sm:$0xff]
  %v173 = vld [vmem:[#allocation4] sm:$0xff]
  %v174 = vpack.c.bf16 %v171, %v171
  %v179 = vunpack.c.l.b16 %v162
  %v180 = vunpack.c.l.b16 %v163
  %v181 = vunpack.c.l.b16 %v164
  %v182 = vunpack.c.l.b16 %v165
  %v183 = vpack.c.b16 %v180, %v179
  %v184 = vpack.c.b16 %v182, %v181
  %v188 = vsel %vm76, %v174, 0
  %190 = vmatprep.subr.bf16.mxu0 0
  %191 = vmatpush1.bf16.msra.mxu0 0
  %192 = vmatprep.subr.bf16.mxu0 0
  %193 = vmatpush1.bf16.msra.mxu0 0
  %194 = vmatprep.subr.bf16.mxu0 0
  %195 = vmatpush1.bf16.msra.mxu0 0
  %196 = vmatprep.subr.bf16.mxu0 0
  %197 = vmatpush1.bf16.msra.mxu0 0
  %198 = vmatprep.subr.bf16.mxu0 0
  %199 = vmatpush1.bf16.msra.mxu0 0
  %200 = vmatprep.subr.bf16.mxu0 0
  %201 = vmatpush1.bf16.msra.mxu0 0
  %202 = vmatprep.subr.bf16.mxu0 0
  %203 = vmatpush1.bf16.msra.mxu0 %v184
  %204 = vmatprep.subr.bf16.mxu0 0
  %205 = vmatpush1.bf16.msra.mxu0 %v183
  %206 = vmatprep.subr.bf16.mxu0 0
  %207 = vmatpush2.bf16.msra.mxu0 0
  %208 = vmatprep.subr.bf16.mxu0 0
  %209 = vmatpush2.bf16.msra.mxu0 0
  %210 = vmatprep.subr.bf16.mxu0 0
  %211 = vmatpush2.bf16.msra.mxu0 0
  %212 = vmatprep.subr.bf16.mxu0 0
  %213 = vmatpush2.bf16.msra.mxu0 0
  %214 = vmatprep.subr.bf16.mxu0 0
  %215 = vmatpush2.bf16.msra.mxu0 0
  %216 = vmatprep.subr.bf16.mxu0 0
  %217 = vmatpush2.bf16.msra.mxu0 0
  %218 = vmatprep.subr.bf16.mxu0 0
  %219 = vmatpush2.bf16.msra.mxu0 0
  %220 = vmatprep.subr.bf16.mxu0 0
  %221 = vmatpush2.bf16.msra.mxu0 0
  %222 = vmatprep.mubr.bf16.mxu0 0
  %223 = vmatmul.mubr.bf16.gmra.mxu0 %v188
  %v224 = vpop.f32.mrf.mxu0
  %v225 = vadd.f32 0.0, %v224
  %v226 = vpop.f32.mrf.mxu0
  %v227 = vpop.f32.mrf.mxu0
  %v228 = vpop.f32.mrf.mxu0
  %229 = vdwg.mxu0
  %v230 = vadd.f32 %v173, %v225
  %v231 = vtanh.pop %v230
  %v232 = vxor.u32 %v230, 2147483648
  %v233 = vmul.f32 %v232, 1.442695
  %v234 = vpow.pop %v233
  %v235 = vadd.f32 %v234, 1.0
  %v236 = vrcp.pop %v235
  %v237 = vmul.f32 1.0, %v236
  %v238 = vsel %vm170, %v231, %v237
  %240 = vrot.lane.b32.xlu0 %v172, 32
  %v241 = vpop.permute.xlu0 %240
  %v243 = vmul.f32 %v238, %v241
  %245 = vrot.lane.b32.xlu0 %v238, 64
  %v246 = vpop.permute.xlu0 %245
  %v248 = vmul.f32 %v238, %v246
  %250 = vrot.lane.b32.xlu0 %v248, 32
  %v251 = vpop.permute.xlu0 %250
  %v253 = vadd.f32 %v243, %v251
  %v254 = vtanh.pop %v253
  %256 = vrot.lane.b32.xlu0 %v254, 64
  %v257 = vpop.permute.xlu0 %256
  %v259 = vmul.f32 %v238, %v257
  %s260 = scalar_lea.vmem [#allocation4], 8
  %v261 = vld [vmem:[%s260] sm:$0xff]
  %v262 = vpack.c.bf16 %v259, %v259
  %264 = vrot.lane.b32.xlu0 %v262, 32
  %v265 = vpop.permute.xlu0 %264
  %v267 = vsel %vm76, %v265, 0
  %269 = vmatprep.subr.bf16.mxu0 0
  %270 = vmatpush1.bf16.msra.mxu0 0
  %271 = vmatprep.subr.bf16.mxu0 0
  %272 = vmatpush1.bf16.msra.mxu0 0
  %273 = vmatprep.subr.bf16.mxu0 0
  %274 = vmatpush1.bf16.msra.mxu0 0
  %275 = vmatprep.subr.bf16.mxu0 0
  %276 = vmatpush1.bf16.msra.mxu0 0
  %277 = vmatprep.subr.bf16.mxu0 0
  %278 = vmatpush1.bf16.msra.mxu0 0
  %279 = vmatprep.subr.bf16.mxu0 0
  %280 = vmatpush1.bf16.msra.mxu0 0
  %281 = vmatprep.subr.bf16.mxu0 0
  %282 = vmatpush1.bf16.msra.mxu0 %v184
  %283 = vmatprep.subr.bf16.mxu0 0
  %284 = vmatpush1.bf16.msra.mxu0 %v183
  %285 = vmatprep.subr.bf16.mxu0 0
  %286 = vmatpush2.bf16.msra.mxu0 0
  %287 = vmatprep.subr.bf16.mxu0 0
  %288 = vmatpush2.bf16.msra.mxu0 0
  %289 = vmatprep.subr.bf16.mxu0 0
  %290 = vmatpush2.bf16.msra.mxu0 0
  %291 = vmatprep.subr.bf16.mxu0 0
  %292 = vmatpush2.bf16.msra.mxu0 0
  %293 = vmatprep.subr.bf16.mxu0 0
  %294 = vmatpush2.bf16.msra.mxu0 0
  %295 = vmatprep.subr.bf16.mxu0 0
  %296 = vmatpush2.bf16.msra.mxu0 0
  %297 = vmatprep.subr.bf16.mxu0 0
  %298 = vmatpush2.bf16.msra.mxu0 0
  %299 = vmatprep.subr.bf16.mxu0 0
  %300 = vmatpush2.bf16.msra.mxu0 0
  %301 = vmatprep.mubr.bf16.mxu0 0
  %302 = vmatmul.mubr.bf16.gmra.mxu0 %v267
  %v303 = vpop.f32.mrf.mxu0
  %v304 = vadd.f32 0.0, %v303
  %v305 = vpop.f32.mrf.mxu0
  %v306 = vpop.f32.mrf.mxu0
  %v307 = vpop.f32.mrf.mxu0
  %308 = vdwg.mxu0
  %v309 = vadd.f32 %v261, %v304
  %v310 = vtanh.pop %v309
  %v311 = vxor.u32 %v309, 2147483648
  %v312 = vmul.f32 %v311, 1.442695
  %v313 = vpow.pop %v312
  %v314 = vadd.f32 %v313, 1.0
  %v315 = vrcp.pop %v314
  %v316 = vmul.f32 1.0, %v315
  %v317 = vsel %vm170, %v310, %v316
  %v318 = vmul.f32 %v317, %v253
  %320 = vrot.lane.b32.xlu0 %v317, 64
  %v321 = vpop.permute.xlu0 %320
  %v323 = vmul.f32 %v317, %v321
  %325 = vrot.lane.b32.xlu0 %v323, 32
  %v326 = vpop.permute.xlu0 %325
  %v328 = vadd.f32 %v318, %v326
  %v329 = vtanh.pop %v328
  %331 = vrot.lane.b32.xlu0 %v329, 64
  %v332 = vpop.permute.xlu0 %331
  %v334 = vmul.f32 %v317, %v332
  %s335 = scalar_lea.vmem [#allocation4], 16
  %v336 = vld [vmem:[%s335] sm:$0xff]
  %v337 = vpack.c.bf16 %v334, %v334
  %339 = vrot.lane.b32.xlu0 %v337, 32
  %v340 = vpop.permute.xlu0 %339
  %v342 = vsel %vm76, %v340, 0
  %344 = vmatprep.subr.bf16.mxu0 0
  %345 = vmatpush1.bf16.msra.mxu0 0
  %346 = vmatprep.subr.bf16.mxu0 0
  %347 = vmatpush1.bf16.msra.mxu0 0
  %348 = vmatprep.subr.bf16.mxu0 0
  %349 = vmatpush1.bf16.msra.mxu0 0
  %350 = vmatprep.subr.bf16.mxu0 0
  %351 = vmatpush1.bf16.msra.mxu0 0
  %352 = vmatprep.subr.bf16.mxu0 0
  %353 = vmatpush1.bf16.msra.mxu0 0
  %354 = vmatprep.subr.bf16.mxu0 0
  %355 = vmatpush1.bf16.msra.mxu0 0
  %356 = vmatprep.subr.bf16.mxu0 0
  %357 = vmatpush1.bf16.msra.mxu0 %v184
  %358 = vmatprep.subr.bf16.mxu0 0
  %359 = vmatpush1.bf16.msra.mxu0 %v183
  %360 = vmatprep.subr.bf16.mxu0 0
  %361 = vmatpush2.bf16.msra.mxu0 0
  %362 = vmatprep.subr.bf16.mxu0 0
  %363 = vmatpush2.bf16.msra.mxu0 0
  %364 = vmatprep.subr.bf16.mxu0 0
  %365 = vmatpush2.bf16.msra.mxu0 0
  %366 = vmatprep.subr.bf16.mxu0 0
  %367 = vmatpush2.bf16.msra.mxu0 0
  %368 = vmatprep.subr.bf16.mxu0 0
  %369 = vmatpush2.bf16.msra.mxu0 0
  %370 = vmatprep.subr.bf16.mxu0 0
  %371 = vmatpush2.bf16.msra.mxu0 0
  %372 = vmatprep.subr.bf16.mxu0 0
  %373 = vmatpush2.bf16.msra.mxu0 0
  %374 = vmatprep.subr.bf16.mxu0 0
  %375 = vmatpush2.bf16.msra.mxu0 0
  %376 = vmatprep.mubr.bf16.mxu0 0
  %377 = vmatmul.mubr.bf16.gmra.mxu0 %v342
  %v378 = vpop.f32.mrf.mxu0
  %v379 = vadd.f32 0.0, %v378
  %v380 = vpop.f32.mrf.mxu0
  %v381 = vpop.f32.mrf.mxu0
  %v382 = vpop.f32.mrf.mxu0
  %383 = vdwg.mxu0
  %v384 = vadd.f32 %v336, %v379
  %v385 = vtanh.pop %v384
  %v386 = vxor.u32 %v384, 2147483648
  %v387 = vmul.f32 %v386, 1.442695
  %v388 = vpow.pop %v387
  %v389 = vadd.f32 %v388, 1.0
  %v390 = vrcp.pop %v389
  %v391 = vmul.f32 1.0, %v390
  %v392 = vsel %vm170, %v385, %v391
  %v393 = vmul.f32 %v392, %v328
  %395 = vrot.lane.b32.xlu0 %v392, 64
  %v396 = vpop.permute.xlu0 %395
  %v398 = vmul.f32 %v392, %v396
  %400 = vrot.lane.b32.xlu0 %v398, 32
  %v401 = vpop.permute.xlu0 %400
  %v403 = vadd.f32 %v393, %v401
  %v404 = vtanh.pop %v403
  %406 = vrot.lane.b32.xlu0 %v404, 64
  %v407 = vpop.permute.xlu0 %406
  %v409 = vmul.f32 %v392, %v407
  %s410 = scalar_lea.vmem [#allocation4], 24
  %v411 = vld [vmem:[%s410] sm:$0xff]
  %v412 = vpack.c.bf16 %v409, %v409
  %414 = vrot.lane.b32.xlu0 %v412, 32
  %v415 = vpop.permute.xlu0 %414
  %v417 = vsel %vm76, %v415, 0
  %419 = vmatprep.subr.bf16.mxu0 0
  %420 = vmatpush1.bf16.msra.mxu0 0
  %421 = vmatprep.subr.bf16.mxu0 0
  %422 = vmatpush1.bf16.msra.mxu0 0
  %423 = vmatprep.subr.bf16.mxu0 0
  %424 = vmatpush1.bf16.msra.mxu0 0
  %425 = vmatprep.subr.bf16.mxu0 0
  %426 = vmatpush1.bf16.msra.mxu0 0
  %427 = vmatprep.subr.bf16.mxu0 0
  %428 = vmatpush1.bf16.msra.mxu0 0
  %429 = vmatprep.subr.bf16.mxu0 0
  %430 = vmatpush1.bf16.msra.mxu0 0
  %431 = vmatprep.subr.bf16.mxu0 0
  %432 = vmatpush1.bf16.msra.mxu0 %v184
  %433 = vmatprep.subr.bf16.mxu0 0
  %434 = vmatpush1.bf16.msra.mxu0 %v183
  %435 = vmatprep.subr.bf16.mxu0 0
  %436 = vmatpush2.bf16.msra.mxu0 0
  %437 = vmatprep.subr.bf16.mxu0 0
  %438 = vmatpush2.bf16.msra.mxu0 0
  %439 = vmatprep.subr.bf16.mxu0 0
  %440 = vmatpush2.bf16.msra.mxu0 0
  %441 = vmatprep.subr.bf16.mxu0 0
  %442 = vmatpush2.bf16.msra.mxu0 0
  %443 = vmatprep.subr.bf16.mxu0 0
  %444 = vmatpush2.bf16.msra.mxu0 0
  %445 = vmatprep.subr.bf16.mxu0 0
  %446 = vmatpush2.bf16.msra.mxu0 0
  %447 = vmatprep.subr.bf16.mxu0 0
  %448 = vmatpush2.bf16.msra.mxu0 0
  %449 = vmatprep.subr.bf16.mxu0 0
  %450 = vmatpush2.bf16.msra.mxu0 0
  %451 = vmatprep.mubr.bf16.mxu0 0
  %452 = vmatmul.mubr.bf16.gmra.mxu0 %v417
  %v453 = vpop.f32.mrf.mxu0
  %v454 = vadd.f32 0.0, %v453
  %v455 = vpop.f32.mrf.mxu0
  %v456 = vpop.f32.mrf.mxu0
  %v457 = vpop.f32.mrf.mxu0
  %458 = vdwg.mxu0
  %v459 = vadd.f32 %v411, %v454
  %v460 = vtanh.pop %v459
  %v461 = vxor.u32 %v459, 2147483648
  %v462 = vmul.f32 %v461, 1.442695
  %v463 = vpow.pop %v462
  %v464 = vadd.f32 %v463, 1.0
  %v465 = vrcp.pop %v464
  %v466 = vmul.f32 1.0, %v465
  %v467 = vsel %vm170, %v460, %v466
  %v468 = vmul.f32 %v467, %v403
  %470 = vrot.lane.b32.xlu0 %v467, 64
  %v471 = vpop.permute.xlu0 %470
  %v473 = vmul.f32 %v467, %v471
  %475 = vrot.lane.b32.xlu0 %v473, 32
  %v476 = vpop.permute.xlu0 %475
  %v478 = vadd.f32 %v468, %v476
  %v479 = vtanh.pop %v478
  %481 = vrot.lane.b32.xlu0 %v479, 64
  %v482 = vpop.permute.xlu0 %481
  %v484 = vmul.f32 %v467, %v482
  %s485 = scalar_lea.vmem [#allocation4], 32
  %v486 = vld [vmem:[%s485] sm:$0xff]
  %v487 = vpack.c.bf16 %v484, %v484
  %489 = vrot.lane.b32.xlu0 %v487, 32
  %v490 = vpop.permute.xlu0 %489
  %v492 = vsel %vm76, %v490, 0
  %494 = vmatprep.subr.bf16.mxu0 0
  %495 = vmatpush1.bf16.msra.mxu0 0
  %496 = vmatprep.subr.bf16.mxu0 0
  %497 = vmatpush1.bf16.msra.mxu0 0
  %498 = vmatprep.subr.bf16.mxu0 0
  %499 = vmatpush1.bf16.msra.mxu0 0
  %500 = vmatprep.subr.bf16.mxu0 0
  %501 = vmatpush1.bf16.msra.mxu0 0
  %502 = vmatprep.subr.bf16.mxu0 0
  %503 = vmatpush1.bf16.msra.mxu0 0
  %504 = vmatprep.subr.bf16.mxu0 0
  %505 = vmatpush1.bf16.msra.mxu0 0
  %506 = vmatprep.subr.bf16.mxu0 0
  %507 = vmatpush1.bf16.msra.mxu0 %v184
  %508 = vmatprep.subr.bf16.mxu0 0
  %509 = vmatpush1.bf16.msra.mxu0 %v183
  %510 = vmatprep.subr.bf16.mxu0 0
  %511 = vmatpush2.bf16.msra.mxu0 0
  %512 = vmatprep.subr.bf16.mxu0 0
  %513 = vmatpush2.bf16.msra.mxu0 0
  %514 = vmatprep.subr.bf16.mxu0 0
  %515 = vmatpush2.bf16.msra.mxu0 0
  %516 = vmatprep.subr.bf16.mxu0 0
  %517 = vmatpush2.bf16.msra.mxu0 0
  %518 = vmatprep.subr.bf16.mxu0 0
  %519 = vmatpush2.bf16.msra.mxu0 0
  %520 = vmatprep.subr.bf16.mxu0 0
  %521 = vmatpush2.bf16.msra.mxu0 0
  %522 = vmatprep.subr.bf16.mxu0 0
  %523 = vmatpush2.bf16.msra.mxu0 0
  %524 = vmatprep.subr.bf16.mxu0 0
  %525 = vmatpush2.bf16.msra.mxu0 0
  %526 = vmatprep.mubr.bf16.mxu0 0
  %527 = vmatmul.mubr.bf16.gmra.mxu0 %v492
  %v528 = vpop.f32.mrf.mxu0
  %v529 = vadd.f32 0.0, %v528
  %v530 = vpop.f32.mrf.mxu0
  %v531 = vpop.f32.mrf.mxu0
  %v532 = vpop.f32.mrf.mxu0
  %533 = vdwg.mxu0
  %v534 = vadd.f32 %v486, %v529
  %v535 = vtanh.pop %v534
  %v536 = vxor.u32 %v534, 2147483648
  %v537 = vmul.f32 %v536, 1.442695
  %v538 = vpow.pop %v537
  %v539 = vadd.f32 %v538, 1.0
  %v540 = vrcp.pop %v539
  %v541 = vmul.f32 1.0, %v540
  %v542 = vsel %vm170, %v535, %v541
  %v543 = vmul.f32 %v542, %v478
  %545 = vrot.lane.b32.xlu0 %v542, 64
  %v546 = vpop.permute.xlu0 %545
  %v548 = vmul.f32 %v542, %v546
  %550 = vrot.lane.b32.xlu0 %v548, 32
  %v551 = vpop.permute.xlu0 %550
  %v553 = vadd.f32 %v543, %v551
  %v554 = vtanh.pop %v553
  %556 = vrot.lane.b32.xlu0 %v554, 64
  %v557 = vpop.permute.xlu0 %556
  %v559 = vmul.f32 %v542, %v557
  %s560 = scalar_lea.vmem [#allocation4], 40
  %v561 = vld [vmem:[%s560] sm:$0xff]
  %v562 = vpack.c.bf16 %v559, %v559
  %564 = vrot.lane.b32.xlu0 %v562, 32
  %v565 = vpop.permute.xlu0 %564
  %v567 = vsel %vm76, %v565, 0
  %569 = vmatprep.subr.bf16.mxu0 0
  %570 = vmatpush1.bf16.msra.mxu0 0
  %571 = vmatprep.subr.bf16.mxu0 0
  %572 = vmatpush1.bf16.msra.mxu0 0
  %573 = vmatprep.subr.bf16.mxu0 0
  %574 = vmatpush1.bf16.msra.mxu0 0
  %575 = vmatprep.subr.bf16.mxu0 0
  %576 = vmatpush1.bf16.msra.mxu0 0
  %577 = vmatprep.subr.bf16.mxu0 0
  %578 = vmatpush1.bf16.msra.mxu0 0
  %579 = vmatprep.subr.bf16.mxu0 0
  %580 = vmatpush1.bf16.msra.mxu0 0
  %581 = vmatprep.subr.bf16.mxu0 0
  %582 = vmatpush1.bf16.msra.mxu0 %v184
  %583 = vmatprep.subr.bf16.mxu0 0
  %584 = vmatpush1.bf16.msra.mxu0 %v183
  %585 = vmatprep.subr.bf16.mxu0 0
  %586 = vmatpush2.bf16.msra.mxu0 0
  %587 = vmatprep.subr.bf16.mxu0 0
  %588 = vmatpush2.bf16.msra.mxu0 0
  %589 = vmatprep.subr.bf16.mxu0 0
  %590 = vmatpush2.bf16.msra.mxu0 0
  %591 = vmatprep.subr.bf16.mxu0 0
  %592 = vmatpush2.bf16.msra.mxu0 0
  %593 = vmatprep.subr.bf16.mxu0 0
  %594 = vmatpush2.bf16.msra.mxu0 0
  %595 = vmatprep.subr.bf16.mxu0 0
  %596 = vmatpush2.bf16.msra.mxu0 0
  %597 = vmatprep.subr.bf16.mxu0 0
  %598 = vmatpush2.bf16.msra.mxu0 0
  %599 = vmatprep.subr.bf16.mxu0 0
  %600 = vmatpush2.bf16.msra.mxu0 0
  %601 = vmatprep.mubr.bf16.mxu0 0
  %602 = vmatmul.mubr.bf16.gmra.mxu0 %v567
  %v603 = vpop.f32.mrf.mxu0
  %v604 = vadd.f32 0.0, %v603
  %v605 = vpop.f32.mrf.mxu0
  %v606 = vpop.f32.mrf.mxu0
  %v607 = vpop.f32.mrf.mxu0
  %608 = vdwg.mxu0
  %v609 = vadd.f32 %v561, %v604
  %v610 = vtanh.pop %v609
  %v611 = vxor.u32 %v609, 2147483648
  %v612 = vmul.f32 %v611, 1.442695
  %v613 = vpow.pop %v612
  %v614 = vadd.f32 %v613, 1.0
  %v615 = vrcp.pop %v614
  %v616 = vmul.f32 1.0, %v615
  %v617 = vsel %vm170, %v610, %v616
  %v618 = vmul.f32 %v617, %v553
  %620 = vrot.lane.b32.xlu0 %v617, 64
  %v621 = vpop.permute.xlu0 %620
  %v623 = vmul.f32 %v617, %v621
  %625 = vrot.lane.b32.xlu0 %v623, 32
  %v626 = vpop.permute.xlu0 %625
  %v628 = vadd.f32 %v618, %v626
  %v629 = vtanh.pop %v628
  %631 = vrot.lane.b32.xlu0 %v629, 64
  %v632 = vpop.permute.xlu0 %631
  %v634 = vmul.f32 %v617, %v632
  %s635 = scalar_lea.vmem [#allocation4], 48
  %v636 = vld [vmem:[%s635] sm:$0xff]
  %v637 = vpack.c.bf16 %v634, %v634
  %639 = vrot.lane.b32.xlu0 %v637, 32
  %v640 = vpop.permute.xlu0 %639
  %v642 = vsel %vm76, %v640, 0
  %644 = vmatprep.subr.bf16.mxu0 0
  %645 = vmatpush1.bf16.msra.mxu0 0
  %646 = vmatprep.subr.bf16.mxu0 0
  %647 = vmatpush1.bf16.msra.mxu0 0
  %648 = vmatprep.subr.bf16.mxu0 0
  %649 = vmatpush1.bf16.msra.mxu0 0
  %650 = vmatprep.subr.bf16.mxu0 0
  %651 = vmatpush1.bf16.msra.mxu0 0
  %652 = vmatprep.subr.bf16.mxu0 0
  %653 = vmatpush1.bf16.msra.mxu0 0
  %654 = vmatprep.subr.bf16.mxu0 0
  %655 = vmatpush1.bf16.msra.mxu0 0
  %656 = vmatprep.subr.bf16.mxu0 0
  %657 = vmatpush1.bf16.msra.mxu0 %v184
  %658 = vmatprep.subr.bf16.mxu0 0
  %659 = vmatpush1.bf16.msra.mxu0 %v183
  %660 = vmatprep.subr.bf16.mxu0 0
  %661 = vmatpush2.bf16.msra.mxu0 0
  %662 = vmatprep.subr.bf16.mxu0 0
  %663 = vmatpush2.bf16.msra.mxu0 0
  %664 = vmatprep.subr.bf16.mxu0 0
  %665 = vmatpush2.bf16.msra.mxu0 0
  %666 = vmatprep.subr.bf16.mxu0 0
  %667 = vmatpush2.bf16.msra.mxu0 0
  %668 = vmatprep.subr.bf16.mxu0 0
  %669 = vmatpush2.bf16.msra.mxu0 0
  %670 = vmatprep.subr.bf16.mxu0 0
  %671 = vmatpush2.bf16.msra.mxu0 0
  %672 = vmatprep.subr.bf16.mxu0 0
  %673 = vmatpush2.bf16.msra.mxu0 0
  %674 = vmatprep.subr.bf16.mxu0 0
  %675 = vmatpush2.bf16.msra.mxu0 0
  %676 = vmatprep.mubr.bf16.mxu0 0
  %677 = vmatmul.mubr.bf16.gmra.mxu0 %v642
  %v678 = vpop.f32.mrf.mxu0
  %v679 = vadd.f32 0.0, %v678
  %v680 = vpop.f32.mrf.mxu0
  %v681 = vpop.f32.mrf.mxu0
  %v682 = vpop.f32.mrf.mxu0
  %683 = vdwg.mxu0
  %v684 = vadd.f32 %v636, %v679
  %v685 = vtanh.pop %v684
  %v686 = vxor.u32 %v684, 2147483648
  %v687 = vmul.f32 %v686, 1.442695
  %v688 = vpow.pop %v687
  %v689 = vadd.f32 %v688, 1.0
  %v690 = vrcp.pop %v689
  %v691 = vmul.f32 1.0, %v690
  %v692 = vsel %vm170, %v685, %v691
  %v693 = vmul.f32 %v692, %v628
  %695 = vrot.lane.b32.xlu0 %v692, 64
  %v696 = vpop.permute.xlu0 %695
  %v698 = vmul.f32 %v692, %v696
  %700 = vrot.lane.b32.xlu0 %v698, 32
  %v701 = vpop.permute.xlu0 %700
  %v703 = vadd.f32 %v693, %v701
  %v704 = vtanh.pop %v703
  %706 = vrot.lane.b32.xlu0 %v704, 64
  %v707 = vpop.permute.xlu0 %706
  %v709 = vmul.f32 %v692, %v707
  %s710 = scalar_lea.vmem [#allocation4], 56
  %v711 = vld [vmem:[%s710] sm:$0xff]
  %v712 = vpack.c.bf16 %v709, %v709
  %714 = vrot.lane.b32.xlu0 %v712, 32
  %v715 = vpop.permute.xlu0 %714
  %v717 = vsel %vm76, %v715, 0
  %719 = vmatprep.subr.bf16.mxu0 0
  %720 = vmatpush1.bf16.msra.mxu0 0
  %721 = vmatprep.subr.bf16.mxu0 0
  %722 = vmatpush1.bf16.msra.mxu0 0
  %723 = vmatprep.subr.bf16.mxu0 0
  %724 = vmatpush1.bf16.msra.mxu0 0
  %725 = vmatprep.subr.bf16.mxu0 0
  %726 = vmatpush1.bf16.msra.mxu0 0
  %727 = vmatprep.subr.bf16.mxu0 0
  %728 = vmatpush1.bf16.msra.mxu0 0
  %729 = vmatprep.subr.bf16.mxu0 0
  %730 = vmatpush1.bf16.msra.mxu0 0
  %731 = vmatprep.subr.bf16.mxu0 0
  %732 = vmatpush1.bf16.msra.mxu0 %v184
  %733 = vmatprep.subr.bf16.mxu0 0
  %734 = vmatpush1.bf16.msra.mxu0 %v183
  %735 = vmatprep.subr.bf16.mxu0 0
  %736 = vmatpush2.bf16.msra.mxu0 0
  %737 = vmatprep.subr.bf16.mxu0 0
  %738 = vmatpush2.bf16.msra.mxu0 0
  %739 = vmatprep.subr.bf16.mxu0 0
  %740 = vmatpush2.bf16.msra.mxu0 0
  %741 = vmatprep.subr.bf16.mxu0 0
  %742 = vmatpush2.bf16.msra.mxu0 0
  %743 = vmatprep.subr.bf16.mxu0 0
  %744 = vmatpush2.bf16.msra.mxu0 0
  %745 = vmatprep.subr.bf16.mxu0 0
  %746 = vmatpush2.bf16.msra.mxu0 0
  %747 = vmatprep.subr.bf16.mxu0 0
  %748 = vmatpush2.bf16.msra.mxu0 0
  %749 = vmatprep.subr.bf16.mxu0 0
  %750 = vmatpush2.bf16.msra.mxu0 0
  %751 = vmatprep.mubr.bf16.mxu0 0
  %752 = vmatmul.mubr.bf16.gmra.mxu0 %v717
  %v753 = vpop.f32.mrf.mxu0
  %v754 = vadd.f32 0.0, %v753
  %v755 = vpop.f32.mrf.mxu0
  %v756 = vpop.f32.mrf.mxu0
  %v757 = vpop.f32.mrf.mxu0
  %758 = vdwg.mxu0
  %v759 = vadd.f32 %v711, %v754
  %v760 = vtanh.pop %v759
  %v761 = vxor.u32 %v759, 2147483648
  %v762 = vmul.f32 %v761, 1.442695
  %v763 = vpow.pop %v762
  %v764 = vadd.f32 %v763, 1.0
  %v765 = vrcp.pop %v764
  %v766 = vmul.f32 1.0, %v765
  %v767 = vsel %vm170, %v760, %v766
  %v768 = vmul.f32 %v767, %v703
  %770 = vrot.lane.b32.xlu0 %v767, 64
  %v771 = vpop.permute.xlu0 %770
  %v773 = vmul.f32 %v767, %v771
  %775 = vrot.lane.b32.xlu0 %v773, 32
  %v776 = vpop.permute.xlu0 %775
  %v778 = vadd.f32 %v768, %v776
  %v779 = vtanh.pop %v778
  %781 = vrot.lane.b32.xlu0 %v779, 64
  %v782 = vpop.permute.xlu0 %781
  %v784 = vmul.f32 %v767, %v782
  %786 = vrot.lane.b32.xlu0 %v784, 32
  %v787 = vpop.permute.xlu0 %786
  %789 = vst.msk [vmem:[#allocation2] sm:$0xff] %vm76, %v787
  %791 = vrot.lane.b32.xlu0 %v778, 96
  %v792 = vpop.permute.xlu0 %791
  %794 = vst.msk [vmem:[#allocation3] sm:$0xff] %vm76, %v792
  // Predicated region
  $region22: #{lstm_aggregate.1} parent=0 // pred_check
    %p795 = pneg %p18
  $region23: #{lstm_aggregate.1} parent=0 // pred_check_branch
    %797 = sbr.rel (%p795) target = $region25
  $region24: #{lstm_aggregate.1} parent=0 // pred_region
    %798 = vst.msk [vmem:[%s4] sm:$0xff] %vm76, %v787
  $region25: #{lstm_aggregate.1} parent=0 // pred_fallthru
    _
  // Predicated region
  $region26: #{lstm_aggregate.1} parent=0 // pred_check
    _
  $region27: #{lstm_aggregate.1} parent=0 // pred_check_branch
    %800 = sbr.rel (0) target = $region29
  $region28: #{lstm_aggregate.1} parent=0 // pred_region
    _
  $region29: #{lstm_aggregate.1} parent=0 // pred_fallthru
    _
  // Predicated region
  $region30: #{lstm_aggregate.1} parent=0 // pred_check
    _
  $region31: #{lstm_aggregate.1} parent=0 // pred_check_branch
    %802 = sbr.rel (0) target = $region33
  $region32: #{lstm_aggregate.1} parent=0 // pred_region
    _
  $region33: #{lstm_aggregate.1} parent=0 // pred_fallthru
    _

</llo_original>
